<compile_context>
chip_gen: v7x
topology: tpu7x:2x2x1
jax: 0.10.0
libtpu: 0.0.40
codegen_flags: <defaults>
</compile_context>

<pallas_src>
import functools

import jax
import jax.numpy as jnp
from jax.experimental import pallas as pl
from jax.experimental.pallas import tpu as pltpu

LANES = 128
MAX_TILE_ROWS = 4096          # 2 MiB per f32 input per tile
MIN_PALLAS_ELEMENTS = 65536   # below this, launch/grid overhead dominates


def _static_pow(x, gamma):
    """x ** gamma with small integer gamma unrolled into VPU multiplies."""
    g = float(gamma)
    if g.is_integer() and 0 <= int(g) <= 8:
        k = int(g)
        if k == 0:
            return jnp.ones_like(x)
        out = x
        for _ in range(k - 1):
            out = out * x
        return out
    return x ** g   # non-integer gamma: exp/log on EUP (slower, still correct)


def _focal_terms(p, t, alpha, gamma):
    """Per-element focal-loss terms (shared by kernel, fallback, reference)."""
    p = p.astype(jnp.float32)
    t = t.astype(jnp.float32)
    is_pos = t > 0.5
    probs = jnp.where(is_pos, p, 1.0 - p)
    probs = jnp.clip(probs, 0.0001, 1.0)
    log_p = jnp.log(probs)
    alpha_w = jnp.where(is_pos, jnp.float32(alpha), jnp.float32(1.0 - alpha))
    focal = _static_pow(1.0 - probs, gamma)
    return -alpha_w * focal * log_p


def _num_tensorcores():
    """2 on chips with two TensorCores per device (v7x), else 1."""
    try:
        kind = jax.devices()[0].device_kind.lower()
    except Exception:
        return 1
    return 2 if "v7" in kind else 1


def _focal_loss_kernel(pred_ref, target_ref, out_ref, *, alpha, gamma, rows,
                       tile_rows, tiles_per_core, first_masked_tile,
                       has_masked_tiles, two_core):
    if two_core:
        c = pl.program_id(0)            # TensorCore split (CORE_PARALLEL)
        i = pl.program_id(1)            # per-core row-tile loop ("arbitrary")
        tile = c * tiles_per_core + i   # un-clamped global tile index
        is_first = i == 0
    else:
        tile = pl.program_id(0)
        is_first = tile == 0

    @pl.when(is_first)
    def _():
        out_ref[...] = jnp.zeros_like(out_ref)

    loss = _focal_terms(pred_ref[...], target_ref[...], alpha, gamma)

    def accumulate(vals):
        # (tile_rows, 128) -> (tile_rows//8, 8, 128) is a layout-preserving
        # sublane split; the leading-axis sum is plain vreg adds (VALU only),
        # so no per-step cross-sublane XLU reduce. Final reduce in wrapper.
        partial = jnp.sum(vals.reshape(tile_rows // 8, 8, LANES), axis=0)
        if len(out_ref.shape) == 3:
            out_ref[...] += partial[None]
        else:
            out_ref[...] += partial

    if not has_masked_tiles:
        accumulate(loss)
    else:
        # Bulk tiles: unmasked accumulation (no iota / compare / select).
        @pl.when(tile < first_masked_tile)
        def _():
            accumulate(loss)

        # Ragged last tile and clamped duplicate tiles: discard rows past the
        # valid range with a select (NOT multiply-by-mask: NaN * 0 = NaN).
        @pl.when(tile >= first_masked_tile)
        def _():
            row_ids = tile * tile_rows + jax.lax.broadcasted_iota(
                jnp.int32, loss.shape, 0)
            accumulate(jnp.where(row_ids < rows, loss, 0.0))


def focal_loss(pred, target, *, alpha=0.25, gamma=2, size_average=True,
               min_pallas_elements=MIN_PALLAS_ELEMENTS):
    """Pallas TPU focal loss matching the PyTorch FocalLoss.forward."""
    pred_flat = jnp.ravel(pred)
    target_flat = jnp.ravel(target)
    n = pred_flat.shape[0]

    # Sublane alignment for BlockSpecs / the in-kernel (G, 8, 128) reshape;
    # sub-32-bit input dtypes need a coarser multiple for packed tiling.
    min_itemsize = min(jnp.dtype(pred_flat.dtype).itemsize,
                       jnp.dtype(target_flat.dtype).itemsize)
    row_align = 8 if min_itemsize >= 4 else 32

    rows = n // LANES
    # Pure-jnp fallback:
    #  * tiny inputs (kernel launch + grid overhead dominates),
    #  * n not a multiple of 128 (a lane-dense reshape would need a
    #    materialized slice/pad copy, doubling HBM traffic),
    #  * fewer aligned rows than one sublane group.
    if n < min_pallas_elements or n % LANES != 0 or rows < row_align:
        total = jnp.sum(
            _focal_terms(pred_flat, target_flat, float(alpha), gamma))
        return total / jnp.float32(n) if size_average else total

    tile_rows = min(MAX_TILE_ROWS, (rows // row_align) * row_align)
    tiles_total = pl.cdiv(rows, tile_rows)
    ragged = (rows % tile_rows) != 0

    ncores = _num_tensorcores()
    two_core = ncores > 1 and tiles_total > 1
    if two_core:
        tiles_per_core = pl.cdiv(tiles_total, ncores)
    else:
        ncores = 1
        tiles_per_core = tiles_total

    # Tiles at/after this index need row masking (ragged tail / duplicates).
    first_masked_tile = tiles_total - 1 if ragged else tiles_total
    has_masked = (ncores * tiles_per_core - 1) >= first_masked_tile

    pred2d = pred_flat.reshape(rows, LANES)      # free reshape (no copy)
    target2d = target_flat.reshape(rows, LANES)

    kernel = functools.partial(
        _focal_loss_kernel,
        alpha=float(alpha), gamma=gamma, rows=rows, tile_rows=tile_rows,
        tiles_per_core=tiles_per_core, first_masked_tile=first_masked_tile,
        has_masked_tiles=has_masked, two_core=two_core)

    if two_core:
        def in_map(c, i):
            # Clamp so no block is fully out of bounds; the kernel masks any
            # duplicated / ragged rows to zero contribution.
            return (jnp.minimum(c * tiles_per_core + i, tiles_total - 1), 0)

        grid = (ncores, tiles_per_core)
        in_specs = [pl.BlockSpec((tile_rows, LANES), in_map),
                    pl.BlockSpec((tile_rows, LANES), in_map)]
        out_specs = pl.BlockSpec((1, 8, LANES), lambda c, i: (c, 0, 0))
        out_shape = jax.ShapeDtypeStruct((ncores, 8, LANES), jnp.float32)
        dims = (getattr(pltpu, "CORE_PARALLEL", "parallel"),
                getattr(pltpu, "ARBITRARY", "arbitrary"))
    else:
        grid = (tiles_total,)
        in_specs = [pl.BlockSpec((tile_rows, LANES), lambda i: (i, 0)),
                    pl.BlockSpec((tile_rows, LANES), lambda i: (i, 0))]
        out_specs = pl.BlockSpec((8, LANES), lambda i: (0, 0))
        out_shape = jax.ShapeDtypeStruct((8, LANES), jnp.float32)
        dims = ("arbitrary",)

    # 2 inputs x 2 pipeline buffers + headroom for elementwise temporaries;
    # capped so we keep headroom on v7x's 64 MiB physical VMEM.
    tile_bytes = tile_rows * LANES * (pred_flat.dtype.itemsize
                                      + target_flat.dtype.itemsize)
    vmem_limit = min(int(2 * tile_bytes) + (20 << 20), 32 << 20)

    partials = pl.pallas_call(
        kernel,
        out_shape=out_shape,
        grid_spec=pltpu.PrefetchScalarGridSpec(
            num_scalar_prefetch=0,
            grid=grid,
            in_specs=in_specs,
            out_specs=out_specs,
        ),
        compiler_params=pltpu.CompilerParams(
            dimension_semantics=dims,
            vmem_limit_bytes=vmem_limit),
    )(pred2d, target2d)

    total = jnp.sum(partials)
    if size_average:
        return total / jnp.float32(n)
    return total


def _focal_loss_ref(pred, target, *, alpha=0.25, gamma=2, size_average=True):
    p = jnp.ravel(pred).astype(jnp.float32)
    t = jnp.ravel(target).astype(jnp.float32)
    probs = jnp.where(t > 0.5, p, 1.0 - p)
    probs = jnp.clip(probs, 0.0001, 1.0)
    log_p = jnp.log(probs)
    a = jnp.where(t > 0.5, alpha, 1.0 - alpha)
    loss = -a * (1.0 - probs) ** gamma * log_p
    return jnp.mean(loss) if size_average else jnp.sum(loss)


if __name__ == "__main__":
    key = jax.random.PRNGKey(0)
    k1, k2, k3, k4 = jax.random.split(key, 4)

    # Small demo shape implied by the module: NCHW probabilities + {0,1} target.
    x = jax.random.uniform(k1, (2, 4, 16, 16), dtype=jnp.float32)
    tgt = jax.random.bernoulli(k2, p=0.3, shape=(2, 4, 16, 16)).astype(
        jnp.float32)

    # min_pallas_elements=0 forces the Pallas path even at this small size.
    out = focal_loss(x, tgt, alpha=0.25, gamma=2, size_average=True,
                     min_pallas_elements=0)
    out = jax.block_until_ready(out)
    ref = _focal_loss_ref(x, tgt, alpha=0.25, gamma=2, size_average=True)
    assert jnp.allclose(out, ref, rtol=1e-5, atol=1e-6), (out, ref)

    # Larger multi-row-tile case, sum reduction, bf16 pred (caller-side
    # bandwidth saving; kernel casts to f32 internally).
    x2 = jax.random.uniform(k3, (4, 8, 64, 64), dtype=jnp.float32).astype(
        jnp.bfloat16)
    t2 = jax.random.bernoulli(k4, p=0.5, shape=(4, 8, 64, 64)).astype(
        jnp.float32)
    out2 = focal_loss(x2, t2, alpha=0.25, gamma=2, size_average=False,
                      min_pallas_elements=0)
    out2 = jax.block_until_ready(out2)
    ref2 = _focal_loss_ref(x2.astype(jnp.float32), t2, alpha=0.25, gamma=2,
                           size_average=False)
    assert jnp.allclose(out2, ref2, rtol=1e-4), (out2, ref2)

    # n % 128 != 0 exercises the fused pure-jnp fallback (no slice/pad copy).
    x3 = jax.random.uniform(k1, (3, 5, 7), dtype=jnp.float32)
    t3 = jax.random.bernoulli(k2, p=0.3, shape=(3, 5, 7)).astype(jnp.float32)
    out3 = jax.block_until_ready(focal_loss(x3, t3))
    ref3 = _focal_loss_ref(x3, t3)
    assert jnp.allclose(out3, ref3, rtol=1e-5, atol=1e-6), (out3, ref3)

    print("KERNEL_OK")
</pallas_src>

<mosaic_0001>
module attributes {stable_mosaic.version = 11 : i64} {
  func.func @_focal_loss_kernel(%arg0: i32, %arg1: memref<16x128xf32, #tpu.memory_space<vmem>>, %arg2: memref<16x128xf32, #tpu.memory_space<vmem>>, %arg3: memref<8x128xf32, #tpu.memory_space<vmem>>) attributes {dimension_semantics = [#tpu.dimension_semantics<arbitrary>], iteration_bounds = array<i64: 1>, scalar_prefetch = 0 : i64, scratch_operands = 0 : i64, tpu.core_type = #tpu.core_type<tc>, window_params = [{transform_indices = @transform_0, window_bounds = array<i64: 16, 128>}, {transform_indices = @transform_1, window_bounds = array<i64: 16, 128>}, {pipeline_mode = #tpu.pipeline_mode<synchronous>, transform_indices = @transform_2, window_bounds = array<i64: 8, 128>}]} {
    %c0_i32 = arith.constant 0 : i32
    %0 = arith.cmpi eq, %arg0, %c0_i32 : i32
    %1 = arith.extui %0 : i1 to i32
    %c0_i32_0 = arith.constant 0 : i32
    %2 = arith.cmpi ne, %1, %c0_i32_0 : i32
    scf.if %2 {
      %cst_16 = arith.constant 0.000000e+00 : f32
      %30 = vector.broadcast %cst_16 : f32 to vector<8x128xf32>
      %c0_17 = arith.constant 0 : index
      %c0_18 = arith.constant 0 : index
      %31 = vector.load %arg3[%c0_17, %c0_18] : memref<8x128xf32, #tpu.memory_space<vmem>>, vector<8x128xf32>
      tpu.vector_store %arg3[%c0_17, %c0_18], %30 {strides = array<i32>} : memref<8x128xf32, #tpu.memory_space<vmem>>, vector<8x128xf32>,
    } else {
    }
    %c0 = arith.constant 0 : index
    %c0_1 = arith.constant 0 : index
    %3 = vector.load %arg1[%c0, %c0_1] : memref<16x128xf32, #tpu.memory_space<vmem>>, vector<16x128xf32>
    %c0_2 = arith.constant 0 : index
    %c0_3 = arith.constant 0 : index
    %4 = vector.load %arg2[%c0_2, %c0_3] : memref<16x128xf32, #tpu.memory_space<vmem>>, vector<16x128xf32>
    %cst = arith.constant 5.000000e-01 : f32
    %5 = vector.broadcast %cst : f32 to vector<16x128xf32>
    %6 = arith.cmpf ogt, %4, %5 : vector<16x128xf32>
    %cst_4 = arith.constant 1.000000e+00 : f32
    %7 = vector.broadcast %cst_4 : f32 to vector<16x128xf32>
    %8 = arith.subf %7, %3 : vector<16x128xf32>
    %9 = arith.select %6, %3, %8 : vector<16x128xi1>, vector<16x128xf32>
    %cst_5 = arith.constant 9.99999974E-5 : f32
    %cst_6 = arith.constant 1.000000e+00 : f32
    %10 = vector.broadcast %cst_5 : f32 to vector<16x128xf32>
    %11 = arith.maximumf %10, %9 : vector<16x128xf32>
    %12 = vector.broadcast %cst_6 : f32 to vector<16x128xf32>
    %13 = arith.minimumf %12, %11 : vector<16x128xf32>
    %14 = math.log %13 : vector<16x128xf32>
    %cst_7 = arith.constant 2.500000e-01 : f32
    %cst_8 = arith.constant 7.500000e-01 : f32
    %15 = vector.broadcast %cst_7 : f32 to vector<16x128xf32>
    %16 = vector.broadcast %cst_8 : f32 to vector<16x128xf32>
    %17 = arith.select %6, %15, %16 : vector<16x128xi1>, vector<16x128xf32>
    %cst_9 = arith.constant 1.000000e+00 : f32
    %18 = vector.broadcast %cst_9 : f32 to vector<16x128xf32>
    %19 = arith.subf %18, %13 : vector<16x128xf32>
    %20 = arith.mulf %19, %19 : vector<16x128xf32>
    %cst_10 = arith.constant 0.000000e+00 : f32
    %21 = vector.broadcast %cst_10 : f32 to vector<16x128xf32>
    %22 = arith.subf %21, %17 : vector<16x128xf32>
    %23 = arith.mulf %22, %20 : vector<16x128xf32>
    %24 = arith.mulf %23, %14 : vector<16x128xf32>
    %25 = vector.shape_cast %24 : vector<16x128xf32> to vector<2x8x128xf32>
    %cst_11 = arith.constant dense<0.000000e+00> : vector<8x128xf32>
    %26 = vector.multi_reduction <add>, %25, %cst_11 [0] : vector<2x8x128xf32> to vector<8x128xf32>
    %c0_12 = arith.constant 0 : index
    %c0_13 = arith.constant 0 : index
    %27 = vector.load %arg3[%c0_12, %c0_13] : memref<8x128xf32, #tpu.memory_space<vmem>>, vector<8x128xf32>
    %28 = arith.addf %27, %26 : vector<8x128xf32>
    %c0_14 = arith.constant 0 : index
    %c0_15 = arith.constant 0 : index
    %29 = vector.load %arg3[%c0_14, %c0_15] : memref<8x128xf32, #tpu.memory_space<vmem>>, vector<8x128xf32>
    tpu.vector_store %arg3[%c0_14, %c0_15], %28 {strides = array<i32>} : memref<8x128xf32, #tpu.memory_space<vmem>>, vector<8x128xf32>,
    return
  }
  func.func @transform_0(%arg0: i32) -> (i32, i32) {
    %c0_i32 = arith.constant 0 : i32
    %c0_i32_0 = arith.constant 0 : i32
    return %arg0, %c0_i32 : i32, i32
  }
  func.func @transform_1(%arg0: i32) -> (i32, i32) {
    %c0_i32 = arith.constant 0 : i32
    %c0_i32_0 = arith.constant 0 : i32
    return %arg0, %c0_i32 : i32, i32
  }
  func.func @transform_2(%arg0: i32) -> (i32, i32) {
    %c0_i32 = arith.constant 0 : i32
    %c0_i32_0 = arith.constant 0 : i32
    %c0_i32_1 = arith.constant 0 : i32
    return %c0_i32, %c0_i32_0 : i32, i32
  }
}

</mosaic_0001>

<llo_original>
// kernel: tpu_custom_call.1
$region0: #{tpu_custom_call.1}
  #allocation0 [shape = 'u32[]', space=smem, size = 0x4, offset = 0x4, fixed_abs, tag = 'smem constant byte address 0x4 - core index']
  #allocation1 [shape = 'u32[144,128]{1,0:T(1,128)}', space=vmem, size = 0x12000, scoped, tag = 'internal scratch']
  %s0 = inlined_call_operand.hbm [shape: f32[16,128], index: 0, kind: input, shape index: {}]
  %s1 = inlined_call_operand.hbm [shape: f32[16,128], index: 1, kind: input, shape index: {}]
  %s2 = inlined_call_operand.hbm [shape: f32[8,128], index: 2, kind: output, shape index: {}]
  %s3 = sld [smem:[#allocation0]]
  $region30: #{tpu_custom_call.1} parent=0
    _
  %s5 = ssub.s32 1, %s3
  %s6 = scalar_select 0, %s5, %s3
  $region1: #{tpu_custom_call.1} parent=0
    #allocation2 [shape = 'u8[8192]{0}', space=vmem, size = 0x2000, scoped, tag = 'input window, operand 0, single buffered']
    #allocation3 [shape = 's32[1]{0}', space=sflag, size = 0x4, scoped, tag = 'scoped memory for tpu_custom_call.1']
    #allocation4 [shape = 's32[1]{0}', space=sflag, size = 0x4, scoped, tag = 'scoped memory for tpu_custom_call.1']
    #allocation5 [shape = 'u8[8192]{0}', space=vmem, size = 0x2000, scoped, tag = 'input window, operand 1, single buffered']
    #allocation6 [shape = 's32[1]{0}', space=sflag, size = 0x4, scoped, tag = 'scoped memory for tpu_custom_call.1']
    #allocation7 [shape = 'u8[4096]{0}', space=vmem, size = 0x1000, scoped, tag = 'output window, operand 0, single buffered']
    %7 = vsyncpa [#allocation3], 0
    %8 = vsyncpa [#allocation6], 0
    %9 = vsyncpa [#allocation4], 0
    // Predicated region
    $region2: #{tpu_custom_call.1} parent=1 // pred_check
      _
    $region3: #{tpu_custom_call.1} parent=1 // pred_check_branch
      %11 = sbr.rel (0) target = $region5
    $region4: #{tpu_custom_call.1} parent=1 // pred_region
      %s13 = ssub.s32 256, 256
      %14 = vsyncadd [#allocation3], %s13
      %s15 = sshll.u32 [#allocation2], 4
      %s16 = int_to_ptr.vmem [resolvable:$true] %s15
      %21 = dma.hbm_to_vmem [thread:$0]  %s0, 256, %s16, [#allocation3], 128, 128, 8
    $region5: #{tpu_custom_call.1} parent=1 // pred_fallthru
      _
    // Predicated region
    $region6: #{tpu_custom_call.1} parent=1 // pred_check
      _
    $region7: #{tpu_custom_call.1} parent=1 // pred_check_branch
      %23 = sbr.rel (0) target = $region9
    $region8: #{tpu_custom_call.1} parent=1 // pred_region
      %s25 = ssub.s32 256, 256
      %26 = vsyncadd [#allocation6], %s25
      %s27 = sshll.u32 [#allocation5], 4
      %s28 = int_to_ptr.vmem [resolvable:$true] %s27
      %33 = dma.hbm_to_vmem [thread:$0]  %s1, 256, %s28, [#allocation6], 128, 128, 8
    $region9: #{tpu_custom_call.1} parent=1 // pred_fallthru
      _
    // Predicated region
    $region10: #{tpu_custom_call.1} parent=1 // pred_check
      _
    $region11: #{tpu_custom_call.1} parent=1 // pred_check_branch
      %35 = sbr.rel (0) target = $region13
    $region12: #{tpu_custom_call.1} parent=1 // pred_region
      %36 = dma.done [#allocation3], 256
    $region13: #{tpu_custom_call.1} parent=1 // pred_fallthru
      _
    // Predicated region
    $region14: #{tpu_custom_call.1} parent=1 // pred_check
      _
    $region15: #{tpu_custom_call.1} parent=1 // pred_check_branch
      %38 = sbr.rel (0) target = $region17
    $region16: #{tpu_custom_call.1} parent=1 // pred_region
      %39 = dma.done [#allocation6], 256
    $region17: #{tpu_custom_call.1} parent=1 // pred_fallthru
      _
    %p40 = scmp.eq.s32.totalorder 0, 0
    // Predicated region
    $region18: #{tpu_custom_call.1} parent=1 // pred_check
      %p41 = pneg %p40
    $region19: #{tpu_custom_call.1} parent=1 // pred_check_branch
      %43 = sbr.rel (%p41) target = $region21
    $region20: #{tpu_custom_call.1} parent=1 // pred_region
      %44 = vst [vmem:[#allocation7] sm:$0xff] 0.0
    $region21: #{tpu_custom_call.1} parent=1 // pred_fallthru
      _
    %v45 = vld [vmem:[#allocation2] sm:$0xff]
    %v46 = vld [vmem:[#allocation2 + $0x8] sm:$0xff]
    %v47 = vld [vmem:[#allocation5] sm:$0xff]
    %v48 = vld [vmem:[#allocation5 + $0x8] sm:$0xff]
    %vm49 = vcmp.gt.f32.partialorder %v47, 0.5
    %vm50 = vcmp.gt.f32.partialorder %v48, 0.5
    %v51 = vsub.f32 1.0, %v45
    %v52 = vsub.f32 1.0, %v46
    %v53 = vsel %vm49, %v45, %v51
    %v54 = vsel %vm50, %v46, %v52
    %v55 = vmax.f32 %v53, 0.0001
    %v56 = vmax.f32 %v54, 0.0001
    %v57 = vmin.f32 %v55, 1.0
    %v58 = vmin.f32 %v56, 1.0
    %v59 = vlog2.pop %v57
    %v60 = vmul.f32 %v59, 0.6931472
    %v61 = vlog2.pop %v58
    %v62 = vmul.f32 %v61, 0.6931472
    %v63 = vsel %vm49, 0.25, 0.75
    %v64 = vsel %vm50, 0.25, 0.75
    %v65 = vsub.f32 1.0, %v57
    %v66 = vsub.f32 1.0, %v58
    %v67 = vmul.f32 %v65, %v65
    %v68 = vmul.f32 %v66, %v66
    %v69 = vsub.f32 0.0, %v63
    %v70 = vsub.f32 0.0, %v64
    %v71 = vmul.f32 %v69, %v67
    %v72 = vmul.f32 %v70, %v68
    %v73 = vmul.f32 %v71, %v60
    %v74 = vmul.f32 %v72, %v62
    %v75 = vadd.f32 %v73, %v74
    %v76 = vld [vmem:[#allocation7] sm:$0xff]
    %v77 = vadd.f32 %v76, %v75
    %78 = vst [vmem:[#allocation7] sm:$0xff] %v77
    // Predicated region
    $region22: #{tpu_custom_call.1} parent=1 // pred_check
      _
    $region23: #{tpu_custom_call.1} parent=1 // pred_check_branch
      %80 = sbr.rel (0) target = $region25
    $region24: #{tpu_custom_call.1} parent=1 // pred_region
      %s82 = ssub.s32 128, 128
      %83 = vsyncadd [#allocation4], %s82
      %s85 = sshll.u32 [#allocation7], 4
      %s86 = int_to_ptr.vmem [resolvable:$true] %s85
      %88 = dma.vmem_to_hbm [thread:$0]  %s86, 128, %s2, [#allocation4]
    $region25: #{tpu_custom_call.1} parent=1 // pred_fallthru
      _
    // Predicated region
    $region26: #{tpu_custom_call.1} parent=1 // pred_check
      _
    $region27: #{tpu_custom_call.1} parent=1 // pred_check_branch
      %90 = sbr.rel (0) target = $region29
    $region28: #{tpu_custom_call.1} parent=1 // pred_region
      %91 = dma.done [#allocation4], 128
    $region29: #{tpu_custom_call.1} parent=1 // pred_fallthru
      _
    %92 = vsyncpa [#allocation3], 1
    %93 = vsyncpa [#allocation6], 1
    %94 = vsyncpa [#allocation4], 1

</llo_original>
